<compile_context>
chip_gen: v5e
topology: v5e:2x2
jax: 0.10.0
libtpu: 0.0.40
codegen_flags: <defaults>
</compile_context>

<pallas_src>
import jax
import jax.numpy as jnp
from jax import lax
from jax.experimental import pallas as pl
from jax.experimental.pallas import tpu as pltpu


def _baseline_kernel(cf: int, seg: int):
    """Blocks: a (TR,128) packed, seg_ones (128,128), wt_bd (128,128), bias (1,128)."""

    def kernel(a_ref, seg_ones_ref, wt_ref, bias_ref, o_ref):
        a = a_ref[...]                                   # (TR, 128), `pack` batch rows / row
        # 1) per-batch-row sum, broadcast across its S-lane segment (MXU).
        s = jnp.dot(a, seg_ones_ref[...], preferred_element_type=jnp.float32)
        # 2) soft one-hot of the clamped score (lane-dense VPU work).
        s = jnp.clip(s, 0.0, float(cf))
        i_f = jnp.floor(s)                               # == .long() for non-negative scores
        frac = s - i_f                                   # == .frac() for non-negative scores
        i_l = i_f.astype(jnp.int32)                      # already <= cf after clip
        i_r = jnp.minimum(i_l + 1, cf)                   # (i + 1).clamp(max=cf)
        lanes = lax.broadcasted_iota(jnp.int32, s.shape, dimension=1)
        cls = jnp.bitwise_and(lanes, seg - 1)            # class index within the segment
        left = (cls == i_l).astype(jnp.float32)
        right = (cls == i_r).astype(jnp.float32)
        one_hot = (1.0 - frac) * left + frac * right     # (TR, 128)
        # 3) Linear: per-segment one_hot @ W.T + bias via block-diagonal W.T (MXU).
        y = jnp.dot(one_hot, wt_ref[...], preferred_element_type=jnp.float32)
        o_ref[...] = y + bias_ref[...]

    return kernel


def _tile_rows(num_rows: int, max_rows: int) -> int:
    """Packed-row tile: full extent when small, else a multiple of 8 giving an
    even number of near-equal grid steps (balances v7x's two TensorCores)."""
    if num_rows <= max_rows:
        return num_rows
    steps = pl.cdiv(num_rows, max_rows)
    if steps % 2:
        steps += 1
    return ((pl.cdiv(num_rows, steps) + 7) // 8) * 8


def baseline_forward(a, b, weight, bias, cf, *, block_rows=1024):
    """a: (B, N) scores, b: (B, N, 4) bboxes (unused), weight: (C, C), bias: (C,)."""
    del b  # Baseline.forward ignores the bbox input.
    B, N = a.shape
    C = cf + 1
    if max(N, C) > 128:
        # TODO(synk): tile the box / class axis for max(N, cf+1) > 128 (not needed here).
        raise NotImplementedError("baseline_forward supports max(N, cf + 1) <= 128")

    # Segment width: power of two >= max(N, C) so one batch row's boxes and its
    # one-hot classes fit in one lane segment; pack = batch rows per 128-lane row.
    seg = max(pl.next_power_of_2(max(N, C)), 1)
    pack = 128 // seg

    a = a.astype(jnp.float32)
    if N < seg:
        a = jnp.pad(a, ((0, 0), (0, seg - N)))           # zero boxes: no effect on the sum
    Bp = pl.cdiv(B, pack) * pack
    if Bp != B:
        a = jnp.pad(a, ((0, Bp - B), (0, 0)))            # padded rows sliced off below
    R = Bp // pack
    a_packed = a.reshape(R, 128)                         # free (pure metadata) when unpadded

    # Trace-time constants; VMEM-resident across all grid steps.
    seg_ids = jnp.arange(128) // seg
    seg_ones = (seg_ids[:, None] == seg_ids[None, :]).astype(jnp.float32)   # (128, 128)
    wt_pad = jnp.zeros((seg, seg), jnp.float32).at[:C, :C].set(
        jnp.asarray(weight, jnp.float32).T)                                 # padded W.T
    wt_bd = jnp.kron(jnp.eye(pack, dtype=jnp.float32), wt_pad)              # (128, 128)
    bias_pad = jnp.zeros((seg,), jnp.float32).at[:C].set(jnp.asarray(bias, jnp.float32))
    bias_tiled = jnp.tile(bias_pad, pack).reshape(1, 128)                   # (1, 128)

    TR = _tile_rows(R, block_rows)
    grid = (pl.cdiv(R, TR),)

    grid_spec = pltpu.PrefetchScalarGridSpec(
        num_scalar_prefetch=0,
        grid=grid,
        in_specs=[
            pl.BlockSpec((TR, 128), lambda i: (i, 0)),    # packed batch stream
            pl.BlockSpec((128, 128), lambda i: (0, 0)),   # segment-sum ones (resident)
            pl.BlockSpec((128, 128), lambda i: (0, 0)),   # block-diagonal W.T (resident)
            pl.BlockSpec((1, 128), lambda i: (0, 0)),     # lane-tiled bias (resident)
        ],
        out_specs=pl.BlockSpec((TR, 128), lambda i: (i, 0)),
    )

    out_packed = pl.pallas_call(
        _baseline_kernel(cf, seg),
        out_shape=jax.ShapeDtypeStruct((R, 128), jnp.float32),
        grid_spec=grid_spec,
        compiler_params=pltpu.CompilerParams(
            dimension_semantics=("parallel",)),           # batch steps shard across TCs (v7x)
    )(a_packed, seg_ones, wt_bd, bias_tiled)

    # Unpack: (R, 128) -> (Bp, seg) -> (B, C).
    return out_packed.reshape(Bp, seg)[:B, :C]


def baseline_reference(a, weight, bias, cf):
    """Plain-JAX reference for correctness checking."""
    s = jnp.clip(jnp.sum(a.astype(jnp.float32), axis=1, keepdims=True), 0.0, float(cf))
    i_f = jnp.floor(s)
    frac = s - i_f
    i_l = i_f.astype(jnp.int32)
    i_r = jnp.minimum(i_l + 1, cf)
    C = cf + 1
    cols = jnp.arange(C)[None, :]
    one_hot = (1.0 - frac) * (cols == i_l) + frac * (cols == i_r)
    return one_hot @ jnp.asarray(weight, jnp.float32).T + jnp.asarray(bias, jnp.float32)[None, :]


if __name__ == "__main__":
    # --- Test 1: small example shapes (cf=15 -> C=16 classes, N=16 boxes). ---
    cf = 15
    C = cf + 1
    B, N = 8, 16

    key = jax.random.PRNGKey(0)
    ka, kb, kw, kbi = jax.random.split(key, 4)
    a = jax.random.uniform(ka, (B, N), dtype=jnp.float32)        # attention weights
    b = jax.random.uniform(kb, (B, N, 4), dtype=jnp.float32)     # bboxes (unused)
    # Baseline.__init__ uses init.eye_ on the Linear weight; add a small
    # non-symmetric perturbation so layout/transpose bugs are caught.
    weight = jnp.eye(C, dtype=jnp.float32) + 0.01 * jax.random.normal(kw, (C, C), dtype=jnp.float32)
    bias = 0.01 * jax.random.normal(kbi, (C,), dtype=jnp.float32)

    out = jax.block_until_ready(baseline_forward(a, b, weight, bias, cf))
    ref = baseline_reference(a, weight, bias, cf)
    assert out.shape == (B, C)
    assert jnp.allclose(out, ref, atol=1e-5, rtol=1e-5)

    # --- Test 2: multi-step grid with a tail block (R=325 packed rows, 6 steps). ---
    B2 = 2600
    a2 = jax.random.uniform(jax.random.PRNGKey(1), (B2, N), dtype=jnp.float32)
    b2 = jnp.zeros((B2, N, 4), dtype=jnp.float32)
    out2 = jax.block_until_ready(baseline_forward(a2, b2, weight, bias, cf, block_rows=64))
    ref2 = baseline_reference(a2, weight, bias, cf)
    assert out2.shape == (B2, C)
    assert jnp.allclose(out2, ref2, atol=1e-5, rtol=1e-5)

    # --- Test 3: padding paths (N < segment, B not a multiple of pack, C=8). ---
    cf3 = 7
    C3 = cf3 + 1
    B3, N3 = 13, 5
    a3 = jax.random.uniform(jax.random.PRNGKey(2), (B3, N3), dtype=jnp.float32)
    b3 = jnp.zeros((B3, N3, 4), dtype=jnp.float32)
    w3 = jnp.eye(C3, dtype=jnp.float32) + 0.01 * jax.random.normal(
        jax.random.PRNGKey(3), (C3, C3), dtype=jnp.float32)
    bias3 = 0.01 * jax.random.normal(jax.random.PRNGKey(4), (C3,), dtype=jnp.float32)
    out3 = jax.block_until_ready(baseline_forward(a3, b3, w3, bias3, cf3))
    ref3 = baseline_reference(a3, w3, bias3, cf3)
    assert out3.shape == (B3, C3)
    assert jnp.allclose(out3, ref3, atol=1e-5, rtol=1e-5)

    print("KERNEL_OK")
</pallas_src>

<mosaic_0001>
module attributes {stable_mosaic.version = 11 : i64} {
  func.func @kernel(%arg0: i32, %arg1: memref<1x128xf32, #tpu.memory_space<vmem>>, %arg2: memref<128x128xf32, #tpu.memory_space<vmem>>, %arg3: memref<128x128xf32, #tpu.memory_space<vmem>>, %arg4: memref<1x128xf32, #tpu.memory_space<vmem>>, %arg5: memref<1x128xf32, #tpu.memory_space<vmem>>) attributes {dimension_semantics = [#tpu.dimension_semantics<parallel>], iteration_bounds = array<i64: 1>, scalar_prefetch = 0 : i64, scratch_operands = 0 : i64, tpu.core_type = #tpu.core_type<tc>, window_params = [{transform_indices = @transform_0, window_bounds = array<i64: 1, 128>}, {pipeline_mode = #tpu.pipeline_mode<synchronous>, transform_indices = @transform_1, window_bounds = array<i64: 128, 128>}, {pipeline_mode = #tpu.pipeline_mode<synchronous>, transform_indices = @transform_2, window_bounds = array<i64: 128, 128>}, {pipeline_mode = #tpu.pipeline_mode<synchronous>, transform_indices = @transform_3, window_bounds = array<i64: 1, 128>}, {transform_indices = @transform_4, window_bounds = array<i64: 1, 128>}]} {
    %c0 = arith.constant 0 : index
    %c0_0 = arith.constant 0 : index
    %0 = vector.load %arg1[%c0, %c0_0] : memref<1x128xf32, #tpu.memory_space<vmem>>, vector<1x128xf32>
    %c0_1 = arith.constant 0 : index
    %c0_2 = arith.constant 0 : index
    %1 = vector.load %arg2[%c0_1, %c0_2] : memref<128x128xf32, #tpu.memory_space<vmem>>, vector<128x128xf32>
    %cst = arith.constant dense<0.000000e+00> : vector<1x128xf32>
    %2 = tpu.matmul %0, %1, %cst {dimension_numbers = #tpu.dot_dimension_numbers<[1], [0], [0], [1], [0, 0, 1, 1], [], []>} : vector<1x128xf32>, vector<128x128xf32>, vector<1x128xf32> -> vector<1x128xf32>
    %cst_3 = arith.constant 0.000000e+00 : f32
    %cst_4 = arith.constant 1.500000e+01 : f32
    %3 = vector.broadcast %cst_3 : f32 to vector<1x128xf32>
    %4 = arith.maximumf %3, %2 : vector<1x128xf32>
    %5 = vector.broadcast %cst_4 : f32 to vector<1x128xf32>
    %6 = arith.minimumf %5, %4 : vector<1x128xf32>
    %7 = math.floor %6 : vector<1x128xf32>
    %8 = arith.subf %6, %7 : vector<1x128xf32>
    %9 = arith.fptosi %7 : vector<1x128xf32> to vector<1x128xi32>
    %c1_i32 = arith.constant 1 : i32
    %10 = vector.broadcast %c1_i32 : i32 to vector<1x128xi32>
    %11 = arith.addi %9, %10 : vector<1x128xi32>
    %c15_i32 = arith.constant 15 : i32
    %12 = vector.broadcast %c15_i32 : i32 to vector<1x128xi32>
    %13 = arith.minsi %11, %12 : vector<1x128xi32>
    %14 = tpu.iota {dimensions = array<i32: 1>} : vector<1x128xi32>
    %c15_i32_5 = arith.constant 15 : i32
    %15 = vector.broadcast %c15_i32_5 : i32 to vector<1x128xi32>
    %16 = arith.andi %14, %15 : vector<1x128xi32>
    %17 = arith.cmpi eq, %16, %9 : vector<1x128xi32>
    %18 = arith.extui %17 : vector<1x128xi1> to vector<1x128xi32>
    %19 = arith.sitofp %18 : vector<1x128xi32> to vector<1x128xf32>
    %20 = arith.cmpi eq, %16, %13 : vector<1x128xi32>
    %21 = arith.extui %20 : vector<1x128xi1> to vector<1x128xi32>
    %22 = arith.sitofp %21 : vector<1x128xi32> to vector<1x128xf32>
    %cst_6 = arith.constant 1.000000e+00 : f32
    %23 = vector.broadcast %cst_6 : f32 to vector<1x128xf32>
    %24 = arith.subf %23, %8 : vector<1x128xf32>
    %25 = arith.mulf %24, %19 : vector<1x128xf32>
    %26 = arith.mulf %8, %22 : vector<1x128xf32>
    %27 = arith.addf %25, %26 : vector<1x128xf32>
    %c0_7 = arith.constant 0 : index
    %c0_8 = arith.constant 0 : index
    %28 = vector.load %arg3[%c0_7, %c0_8] : memref<128x128xf32, #tpu.memory_space<vmem>>, vector<128x128xf32>
    %cst_9 = arith.constant dense<0.000000e+00> : vector<1x128xf32>
    %29 = tpu.matmul %27, %28, %cst_9 {dimension_numbers = #tpu.dot_dimension_numbers<[1], [0], [0], [1], [0, 0, 1, 1], [], []>} : vector<1x128xf32>, vector<128x128xf32>, vector<1x128xf32> -> vector<1x128xf32>
    %c0_10 = arith.constant 0 : index
    %c0_11 = arith.constant 0 : index
    %30 = vector.load %arg4[%c0_10, %c0_11] : memref<1x128xf32, #tpu.memory_space<vmem>>, vector<1x128xf32>
    %31 = arith.addf %29, %30 : vector<1x128xf32>
    %c0_12 = arith.constant 0 : index
    %c0_13 = arith.constant 0 : index
    %32 = vector.load %arg5[%c0_12, %c0_13] : memref<1x128xf32, #tpu.memory_space<vmem>>, vector<1x128xf32>
    tpu.vector_store %arg5[%c0_12, %c0_13], %31 {strides = array<i32>} : memref<1x128xf32, #tpu.memory_space<vmem>>, vector<1x128xf32>,
    return
  }
  func.func @transform_0(%arg0: i32) -> (i32, i32) {
    %c0_i32 = arith.constant 0 : i32
    %c0_i32_0 = arith.constant 0 : i32
    return %arg0, %c0_i32 : i32, i32
  }
  func.func @transform_1(%arg0: i32) -> (i32, i32) {
    %c0_i32 = arith.constant 0 : i32
    %c0_i32_0 = arith.constant 0 : i32
    %c0_i32_1 = arith.constant 0 : i32
    return %c0_i32, %c0_i32_0 : i32, i32
  }
  func.func @transform_2(%arg0: i32) -> (i32, i32) {
    %c0_i32 = arith.constant 0 : i32
    %c0_i32_0 = arith.constant 0 : i32
    %c0_i32_1 = arith.constant 0 : i32
    return %c0_i32, %c0_i32_0 : i32, i32
  }
  func.func @transform_3(%arg0: i32) -> (i32, i32) {
    %c0_i32 = arith.constant 0 : i32
    %c0_i32_0 = arith.constant 0 : i32
    %c0_i32_1 = arith.constant 0 : i32
    return %c0_i32, %c0_i32_0 : i32, i32
  }
  func.func @transform_4(%arg0: i32) -> (i32, i32) {
    %c0_i32 = arith.constant 0 : i32
    %c0_i32_0 = arith.constant 0 : i32
    return %arg0, %c0_i32 : i32, i32
  }
}

</mosaic_0001>

<llo_original>
// kernel: tpu_custom_call.1
$region0: #{tpu_custom_call.1}
  #allocation0 [shape = 'u32[]', space=smem, size = 0x4, offset = 0x4, fixed_abs, tag = 'smem constant byte address 0x4 - core index']
  #allocation1 [shape = 'u32[72,128]{1,0:T(1,128)}', space=vmem, size = 0x9000, scoped, tag = 'internal scratch']
  %s0 = inlined_call_operand.hbm [shape: f32[1,128], index: 0, kind: input, shape index: {}]
  %s1 = inlined_call_operand.hbm [shape: f32[128,128], index: 1, kind: input, shape index: {}]
  %s2 = inlined_call_operand.hbm [shape: f32[128,128], index: 2, kind: input, shape index: {}]
  %s3 = inlined_call_operand.vmem [shape: f32[1,128], index: 3, kind: input, shape index: {}]
  %s4 = inlined_call_operand.hbm [shape: f32[1,128], index: 4, kind: output, shape index: {}]
  %s5 = sld [smem:[#allocation0]]
  $region38: #{tpu_custom_call.1} parent=0
    _
  %s7 = ssub.s32 1, %s5
  %s8 = scalar_select 0, %s7, %s5
  $region1: #{tpu_custom_call.1} parent=0
    #allocation2 [shape = 'u8[512]{0}', space=vmem, size = 0x400, scoped, tag = 'input window, operand 0, single buffered']
    #allocation3 [shape = 's32[1]{0}', space=sflag, size = 0x4, scoped, tag = 'scoped memory for tpu_custom_call.1']
    #allocation4 [shape = 's32[1]{0}', space=sflag, size = 0x4, scoped, tag = 'scoped memory for tpu_custom_call.1']
    #allocation5 [shape = 'u8[65536]{0}', space=vmem, size = 0x10000, scoped, tag = 'input window, operand 1, single buffered']
    #allocation6 [shape = 's32[1]{0}', space=sflag, size = 0x4, scoped, tag = 'scoped memory for tpu_custom_call.1']
    #allocation7 [shape = 'u8[65536]{0}', space=vmem, size = 0x10000, scoped, tag = 'input window, operand 2, single buffered']
    #allocation8 [shape = 'u8[512]{0}', space=vmem, size = 0x400, scoped, tag = 'output window, operand 0, single buffered']
    %9 = vsyncpa [#allocation3], 0
    %10 = vsyncpa [#allocation6], 0
    %11 = vsyncpa [#allocation4], 0
    // Predicated region
    $region2: #{tpu_custom_call.1} parent=1 // pred_check
      _
    $region3: #{tpu_custom_call.1} parent=1 // pred_check_branch
      %13 = sbr.rel (0) target = $region5
    $region4: #{tpu_custom_call.1} parent=1 // pred_region
      %15 = vsyncadd [#allocation3], 0
      %s17 = sshll.u32 %s0, 4
      %s18 = int_to_ptr.hbm [resolvable:$true] %s17
      %s19 = sshll.u32 [#allocation2], 4
      %s20 = int_to_ptr.vmem [resolvable:$true] %s19
      %22 = dma.hbm_to_vmem [thread:$0]  %s18, 16, %s20, [#allocation3]
    $region5: #{tpu_custom_call.1} parent=1 // pred_fallthru
      _
    // Predicated region
    $region6: #{tpu_custom_call.1} parent=1 // pred_check
      _
    $region7: #{tpu_custom_call.1} parent=1 // pred_check_branch
      %24 = sbr.rel (0) target = $region9
    $region8: #{tpu_custom_call.1} parent=1 // pred_region
      %26 = vsyncadd [#allocation6], 0
      %s27 = sshll.u32 %s1, 4
      %s28 = int_to_ptr.hbm [resolvable:$true] %s27
      %s29 = sshll.u32 [#allocation5], 4
      %s30 = int_to_ptr.vmem [resolvable:$true] %s29
      %35 = dma.hbm_to_vmem [thread:$0]  %s28, 2048, %s30, [#allocation6], 128, 128, 8
    $region9: #{tpu_custom_call.1} parent=1 // pred_fallthru
      _
    // Predicated region
    $region10: #{tpu_custom_call.1} parent=1 // pred_check
      _
    $region11: #{tpu_custom_call.1} parent=1 // pred_check_branch
      %37 = sbr.rel (0) target = $region13
    $region12: #{tpu_custom_call.1} parent=1 // pred_region
      %39 = vsyncadd [#allocation6], 0
      %s40 = sshll.u32 %s2, 4
      %s41 = int_to_ptr.hbm [resolvable:$true] %s40
      %s42 = sshll.u32 [#allocation7], 4
      %s43 = int_to_ptr.vmem [resolvable:$true] %s42
      %48 = dma.hbm_to_vmem [thread:$0]  %s41, 2048, %s43, [#allocation6], 128, 128, 8
    $region13: #{tpu_custom_call.1} parent=1 // pred_fallthru
      _
    // Predicated region
    $region14: #{tpu_custom_call.1} parent=1 // pred_check
      _
    $region15: #{tpu_custom_call.1} parent=1 // pred_check_branch
      %50 = sbr.rel (0) target = $region17
    $region16: #{tpu_custom_call.1} parent=1 // pred_region
      _
    $region17: #{tpu_custom_call.1} parent=1 // pred_fallthru
      _
    // Predicated region
    $region18: #{tpu_custom_call.1} parent=1 // pred_check
      _
    $region19: #{tpu_custom_call.1} parent=1 // pred_check_branch
      %52 = sbr.rel (0) target = $region21
    $region20: #{tpu_custom_call.1} parent=1 // pred_region
      %54 = dma.done [#allocation3], 16
    $region21: #{tpu_custom_call.1} parent=1 // pred_fallthru
      _
    // Predicated region
    $region22: #{tpu_custom_call.1} parent=1 // pred_check
      _
    $region23: #{tpu_custom_call.1} parent=1 // pred_check_branch
      %56 = sbr.rel (0) target = $region25
    $region24: #{tpu_custom_call.1} parent=1 // pred_region
      %58 = dma.done [#allocation6], 2048
    $region25: #{tpu_custom_call.1} parent=1 // pred_fallthru
      _
    // Predicated region
    $region26: #{tpu_custom_call.1} parent=1 // pred_check
      _
    $region27: #{tpu_custom_call.1} parent=1 // pred_check_branch
      %60 = sbr.rel (0) target = $region29
    $region28: #{tpu_custom_call.1} parent=1 // pred_region
      %62 = dma.done [#allocation6], 2048
    $region29: #{tpu_custom_call.1} parent=1 // pred_fallthru
      _
    %v63 = vld [vmem:[#allocation2] sm:$0x1]
    %v64 = vld [vmem:[#allocation5] sm:$0xff]
    %v65 = vld [vmem:[#allocation5 + $0x8] sm:$0xff]
    %v66 = vld [vmem:[#allocation5 + $0x10] sm:$0xff]
    %v67 = vld [vmem:[#allocation5 + $0x18] sm:$0xff]
    %v68 = vld [vmem:[#allocation5 + $0x20] sm:$0xff]
    %v69 = vld [vmem:[#allocation5 + $0x28] sm:$0xff]
    %v70 = vld [vmem:[#allocation5 + $0x30] sm:$0xff]
    %v71 = vld [vmem:[#allocation5 + $0x38] sm:$0xff]
    %v72 = vld [vmem:[#allocation5 + $0x40] sm:$0xff]
    %v73 = vld [vmem:[#allocation5 + $0x48] sm:$0xff]
    %v74 = vld [vmem:[#allocation5 + $0x50] sm:$0xff]
    %v75 = vld [vmem:[#allocation5 + $0x58] sm:$0xff]
    %v76 = vld [vmem:[#allocation5 + $0x60] sm:$0xff]
    %v77 = vld [vmem:[#allocation5 + $0x68] sm:$0xff]
    %v78 = vld [vmem:[#allocation5 + $0x70] sm:$0xff]
    %v79 = vld [vmem:[#allocation5 + $0x78] sm:$0xff]
    %80 = vmatpush.msra.mxu0 %v79
    %81 = vmatpush.msra.mxu0 %v78
    %82 = vmatpush.msra.mxu0 %v77
    %83 = vmatpush.msra.mxu0 %v76
    %84 = vmatpush.msra.mxu0 %v75
    %85 = vmatpush.msra.mxu0 %v74
    %86 = vmatpush.msra.mxu0 %v73
    %87 = vmatpush.msra.mxu0 %v72
    %88 = vmatpush.msra.mxu0 %v71
    %89 = vmatpush.msra.mxu0 %v70
    %90 = vmatpush.msra.mxu0 %v69
    %91 = vmatpush.msra.mxu0 %v68
    %92 = vmatpush.msra.mxu0 %v67
    %93 = vmatpush.msra.mxu0 %v66
    %94 = vmatpush.msra.mxu0 %v65
    %95 = vmatpush.msra.mxu0 %v64
    %96 = vmatmul.f32.gmra.mxu0 %v63
    %v97 = vpop.f32.mrf.mxu0
    %v98 = vadd.f32 0.0, %v97
    %99 = vdwg.mxu0
    %v100 = vmax.f32 %v98, 0.0
    %v101 = vmin.f32 %v100, 15.0
    %v102 = vfloor.f32 %v101
    %v103 = vsub.f32 %v101, %v102
    %v104 = vcvt.f32.s32.to.zero.pseudo %v102
    %v105 = vadd.s32 %v104, 1
    %vm106 = vcmp.lt.s32.totalorder %v105, 15
    %v107 = vsel %vm106, %v105, 15
    %v108 = vlaneseq
    %v109 = vand.u32 %v108, 127
    %v110 = vand.u32 %v109, 15
    %vm111 = vcmp.eq.s32.totalorder %v110, %v104
    %v112 = vsel %vm111, 1, 0
    %v113 = vcvt.s32.f32 %v112
    %vm114 = vcmp.eq.s32.totalorder %v110, %v107
    %v115 = vsel %vm114, 1, 0
    %v116 = vcvt.s32.f32 %v115
    %v117 = vsub.f32 1.0, %v103
    %v118 = vmul.f32 %v117, %v113
    %v119 = vmul.f32 %v103, %v116
    %v120 = vadd.f32 %v118, %v119
    %v121 = vld [vmem:[#allocation7] sm:$0xff]
    %v122 = vld [vmem:[#allocation7 + $0x8] sm:$0xff]
    %v123 = vld [vmem:[#allocation7 + $0x10] sm:$0xff]
    %v124 = vld [vmem:[#allocation7 + $0x18] sm:$0xff]
    %v125 = vld [vmem:[#allocation7 + $0x20] sm:$0xff]
    %v126 = vld [vmem:[#allocation7 + $0x28] sm:$0xff]
    %v127 = vld [vmem:[#allocation7 + $0x30] sm:$0xff]
    %v128 = vld [vmem:[#allocation7 + $0x38] sm:$0xff]
    %v129 = vld [vmem:[#allocation7 + $0x40] sm:$0xff]
    %v130 = vld [vmem:[#allocation7 + $0x48] sm:$0xff]
    %v131 = vld [vmem:[#allocation7 + $0x50] sm:$0xff]
    %v132 = vld [vmem:[#allocation7 + $0x58] sm:$0xff]
    %v133 = vld [vmem:[#allocation7 + $0x60] sm:$0xff]
    %v134 = vld [vmem:[#allocation7 + $0x68] sm:$0xff]
    %v135 = vld [vmem:[#allocation7 + $0x70] sm:$0xff]
    %v136 = vld [vmem:[#allocation7 + $0x78] sm:$0xff]
    %v137 = vld [vmem:[%s3] sm:$0x1]
    %138 = vmatpush.msra.mxu0 %v136
    %139 = vmatpush.msra.mxu0 %v135
    %140 = vmatpush.msra.mxu0 %v134
    %141 = vmatpush.msra.mxu0 %v133
    %142 = vmatpush.msra.mxu0 %v132
    %143 = vmatpush.msra.mxu0 %v131
    %144 = vmatpush.msra.mxu0 %v130
    %145 = vmatpush.msra.mxu0 %v129
    %146 = vmatpush.msra.mxu0 %v128
    %147 = vmatpush.msra.mxu0 %v127
    %148 = vmatpush.msra.mxu0 %v126
    %149 = vmatpush.msra.mxu0 %v125
    %150 = vmatpush.msra.mxu0 %v124
    %151 = vmatpush.msra.mxu0 %v123
    %152 = vmatpush.msra.mxu0 %v122
    %153 = vmatpush.msra.mxu0 %v121
    %154 = vmatmul.f32.gmra.mxu0 %v120
    %v155 = vpop.f32.mrf.mxu0
    %v156 = vadd.f32 %v137, %v155
    %157 = vdwg.mxu0
    %158 = vst [vmem:[#allocation8] sm:$0x1] %v156
    // Predicated region
    $region30: #{tpu_custom_call.1} parent=1 // pred_check
      _
    $region31: #{tpu_custom_call.1} parent=1 // pred_check_branch
      %160 = sbr.rel (0) target = $region33
    $region32: #{tpu_custom_call.1} parent=1 // pred_region
      %162 = vsyncadd [#allocation4], 0
      %s164 = sshll.u32 [#allocation8], 4
      %s165 = int_to_ptr.vmem [resolvable:$true] %s164
      %s166 = sshll.u32 %s4, 4
      %s167 = int_to_ptr.hbm [resolvable:$true] %s166
      %169 = dma.vmem_to_hbm [thread:$0]  %s165, 16, %s167, [#allocation4]
    $region33: #{tpu_custom_call.1} parent=1 // pred_fallthru
      _
    // Predicated region
    $region34: #{tpu_custom_call.1} parent=1 // pred_check
      _
    $region35: #{tpu_custom_call.1} parent=1 // pred_check_branch
      %171 = sbr.rel (0) target = $region37
    $region36: #{tpu_custom_call.1} parent=1 // pred_region
      %173 = dma.done [#allocation4], 16
    $region37: #{tpu_custom_call.1} parent=1 // pred_fallthru
      _
    %174 = vsyncpa [#allocation3], 1
    %175 = vsyncpa [#allocation6], 1
    %176 = vsyncpa [#allocation4], 1

</llo_original>
